<compile_context>
chip_gen: v7x
topology: tpu7x:2x2x1
jax: 0.10.0
libtpu: 0.0.40
codegen_flags: <defaults>
</compile_context>

<pallas_src>
import functools

import jax
import jax.numpy as jnp
from jax.experimental import pallas as pl
from jax.experimental.pallas import tpu as pltpu

_VMEM_LIMIT = 56 * 1024 * 1024   # fits v7x (64 MiB VMEM) with headroom
_EPS = 1e-5


# ----------------------------- helpers ---------------------------------------
def _round_up(x, m):
    return ((x + m - 1) // m) * m


def _row_spec(tm, ncols):
    return pl.BlockSpec((tm, ncols), lambda i: (i, 0))


def _const_spec(shape):
    return pl.BlockSpec(shape, lambda i: (0,) * len(shape))


def _layernorm_f32(x, g, b, eps):
    mean = jnp.mean(x, axis=-1, keepdims=True)
    xc = x - mean
    var = jnp.mean(xc * xc, axis=-1, keepdims=True)
    return xc * jax.lax.rsqrt(var + eps) * g + b


# --------------------- kernel 1: LN + QKV projections ------------------------
def _ln_qkv_kernel(x_ref, g_ref, b_ref, wqkv_ref, wq_ref, wk_ref, wv_ref,
                   o_ref, *, eps, inner):
    x = x_ref[...].astype(jnp.float32)
    g = g_ref[...].astype(jnp.float32)
    b = b_ref[...].astype(jnp.float32)
    xn = _layernorm_f32(x, g, b, eps)

    wdt = wqkv_ref.dtype                       # feed MXU in the weights' dtype
    qkv0 = jnp.dot(xn.astype(wdt), wqkv_ref[...],
                   preferred_element_type=jnp.float32)           # (tm, 3*inner)
    q0 = qkv0[:, :inner]
    k0 = qkv0[:, inner:2 * inner]
    v0 = qkv0[:, 2 * inner:]
    q = jnp.dot(q0.astype(wdt), wq_ref[...], preferred_element_type=jnp.float32)
    k = jnp.dot(k0.astype(wdt), wk_ref[...], preferred_element_type=jnp.float32)
    v = jnp.dot(v0.astype(wdt), wv_ref[...], preferred_element_type=jnp.float32)
    o_ref[...] = jnp.concatenate([q, k, v], axis=-1).astype(o_ref.dtype)


def ln_qkv_proj(x2d, gamma, beta, to_qkv_w, in_proj_w, *, eps=_EPS, tm=256):
    """x2d: (n, dim). to_qkv_w: (3*inner, dim), in_proj_w: (3*inner, inner)."""
    n, dim = x2d.shape
    three_inner = to_qkv_w.shape[0]
    inner = three_inner // 3
    tm = max(8, min(tm, _round_up(n, 8)))
    grid = (pl.cdiv(n, tm),)

    wqkv_t = to_qkv_w.T                       # (dim, 3*inner)
    wq_t = in_proj_w[:inner].T                # (inner, inner)
    wk_t = in_proj_w[inner:2 * inner].T
    wv_t = in_proj_w[2 * inner:].T

    flops = 2 * n * dim * three_inner + 3 * (2 * n * inner * inner)
    bytes_accessed = 4 * (n * dim + dim * three_inner + 3 * inner * inner
                          + n * three_inner + 2 * dim)

    return pl.pallas_call(
        functools.partial(_ln_qkv_kernel, eps=eps, inner=inner),
        out_shape=jax.ShapeDtypeStruct((n, three_inner), x2d.dtype),
        grid_spec=pltpu.PrefetchScalarGridSpec(
            num_scalar_prefetch=0,
            grid=grid,
            in_specs=[
                _row_spec(tm, dim),
                _const_spec((1, dim)), _const_spec((1, dim)),
                _const_spec((dim, three_inner)),
                _const_spec((inner, inner)), _const_spec((inner, inner)),
                _const_spec((inner, inner)),
            ],
            out_specs=_row_spec(tm, three_inner),
        ),
        compiler_params=pltpu.CompilerParams(
            dimension_semantics=("parallel",),
            vmem_limit_bytes=_VMEM_LIMIT),
        cost_estimate=pl.CostEstimate(flops=flops, transcendentals=n,
                                      bytes_accessed=bytes_accessed),
    )(x2d, gamma.reshape(1, dim), beta.reshape(1, dim), wqkv_t, wq_t, wk_t, wv_t)


# --------------------- kernel 2: attention core (per batch*head) -------------
def _attn_core_kernel(q_ref, k_ref, v_ref, o_ref, *, scale):
    q = q_ref[0]                               # (seq, dh)
    k = k_ref[0]
    v = v_ref[0]
    s = jax.lax.dot_general(q, k, (((1,), (1,)), ((), ())),
                            preferred_element_type=jnp.float32) * scale
    s = s - jnp.max(s, axis=-1, keepdims=True)
    p = jnp.exp(s)
    p = p / jnp.sum(p, axis=-1, keepdims=True)
    o = jnp.dot(p.astype(v.dtype), v, preferred_element_type=jnp.float32)
    o_ref[0] = o.astype(o_ref.dtype)


def _bh_spec(seq, dh):
    return pl.BlockSpec((1, seq, dh), lambda i: (i, 0, 0))


def mha_core(q, k, v, *, scale):
    """q, k, v: (batch*heads, seq, head_dim) -> context, same shape."""
    bh, seq, dh = q.shape
    flops = 2 * (2 * bh * seq * seq * dh)
    bytes_accessed = 4 * 4 * bh * seq * dh
    return pl.pallas_call(
        functools.partial(_attn_core_kernel, scale=scale),
        out_shape=jax.ShapeDtypeStruct((bh, seq, dh), q.dtype),
        grid_spec=pltpu.PrefetchScalarGridSpec(
            num_scalar_prefetch=0,
            grid=(bh,),
            in_specs=[_bh_spec(seq, dh), _bh_spec(seq, dh), _bh_spec(seq, dh)],
            out_specs=_bh_spec(seq, dh),
        ),
        compiler_params=pltpu.CompilerParams(
            dimension_semantics=("parallel",),
            vmem_limit_bytes=_VMEM_LIMIT),
        cost_estimate=pl.CostEstimate(flops=flops, transcendentals=bh * seq * seq,
                                      bytes_accessed=bytes_accessed),
    )(q, k, v)


# --------------------- kernel 3: output projections + residual ---------------
def _attn_out_kernel(ctx_ref, wo_ref, wout_ref, res_ref, o_ref):
    wdt = wo_ref.dtype
    c = ctx_ref[...]
    h = jnp.dot(c.astype(wdt), wo_ref[...], preferred_element_type=jnp.float32)
    y = jnp.dot(h.astype(wdt), wout_ref[...], preferred_element_type=jnp.float32)
    o_ref[...] = (y + res_ref[...].astype(jnp.float32)).astype(o_ref.dtype)


def attn_out_proj(ctx2d, out_proj_w, to_out_w, resid2d, *, tm=256):
    """out_proj_w: (inner, inner), to_out_w: (dim, inner)."""
    n, inner = ctx2d.shape
    dim = to_out_w.shape[0]
    tm = max(8, min(tm, _round_up(n, 8)))
    grid = (pl.cdiv(n, tm),)
    flops = 2 * n * inner * inner + 2 * n * inner * dim
    bytes_accessed = 4 * (n * inner + inner * inner + inner * dim + 2 * n * dim)
    return pl.pallas_call(
        _attn_out_kernel,
        out_shape=jax.ShapeDtypeStruct((n, dim), resid2d.dtype),
        grid_spec=pltpu.PrefetchScalarGridSpec(
            num_scalar_prefetch=0,
            grid=grid,
            in_specs=[
                _row_spec(tm, inner),
                _const_spec((inner, inner)),
                _const_spec((inner, dim)),
                _row_spec(tm, dim),
            ],
            out_specs=_row_spec(tm, dim),
        ),
        compiler_params=pltpu.CompilerParams(
            dimension_semantics=("parallel",),
            vmem_limit_bytes=_VMEM_LIMIT),
        cost_estimate=pl.CostEstimate(flops=flops, transcendentals=0,
                                      bytes_accessed=bytes_accessed),
    )(ctx2d, out_proj_w.T, to_out_w.T, resid2d)


# --------------------- kernel 4: fused FFN block (+ residual) -----------------
def _ffn_kernel(x_ref, g_ref, b_ref, w1_ref, b1_ref, w2_ref, b2_ref, o_ref, *, eps):
    x = x_ref[...].astype(jnp.float32)
    g = g_ref[...].astype(jnp.float32)
    b = b_ref[...].astype(jnp.float32)
    xn = _layernorm_f32(x, g, b, eps)

    wdt = w1_ref.dtype
    h = jnp.dot(xn.astype(wdt), w1_ref[...], preferred_element_type=jnp.float32)
    h = h + b1_ref[...].astype(jnp.float32)
    # exact erf-based GELU (matches nn.GELU() default)
    h = 0.5 * h * (1.0 + jax.lax.erf(h * jnp.float32(0.7071067811865476)))
    y = jnp.dot(h.astype(wdt), w2_ref[...], preferred_element_type=jnp.float32)
    y = y + b2_ref[...].astype(jnp.float32)
    o_ref[...] = (y + x).astype(o_ref.dtype)   # fused residual: FFN(x) + x


def ffn_block(x2d, gamma, beta, w1, b1, w2, b2, *, eps=_EPS, tm=256):
    """w1: (hidden, dim), w2: (dim, hidden) — PyTorch nn.Linear layout."""
    n, dim = x2d.shape
    hidden = w1.shape[0]
    tm = max(8, min(tm, _round_up(n, 8)))
    grid = (pl.cdiv(n, tm),)
    flops = 2 * (2 * n * dim * hidden)
    bytes_accessed = 4 * (2 * n * dim + 2 * dim * hidden + 3 * dim + hidden)
    return pl.pallas_call(
        functools.partial(_ffn_kernel, eps=eps),
        out_shape=jax.ShapeDtypeStruct((n, dim), x2d.dtype),
        grid_spec=pltpu.PrefetchScalarGridSpec(
            num_scalar_prefetch=0,
            grid=grid,
            in_specs=[
                _row_spec(tm, dim),
                _const_spec((1, dim)), _const_spec((1, dim)),
                _const_spec((dim, hidden)), _const_spec((1, hidden)),
                _const_spec((hidden, dim)), _const_spec((1, dim)),
            ],
            out_specs=_row_spec(tm, dim),
        ),
        compiler_params=pltpu.CompilerParams(
            dimension_semantics=("parallel",),
            vmem_limit_bytes=_VMEM_LIMIT),
        cost_estimate=pl.CostEstimate(flops=flops, transcendentals=n * hidden,
                                      bytes_accessed=bytes_accessed),
    )(x2d, gamma.reshape(1, dim), beta.reshape(1, dim),
      w1.T, b1.reshape(1, hidden), w2.T, b2.reshape(1, dim))


# --------------------- kernel 5: final LayerNorm ------------------------------
def _ln_kernel(x_ref, g_ref, b_ref, o_ref, *, eps):
    x = x_ref[...].astype(jnp.float32)
    g = g_ref[...].astype(jnp.float32)
    b = b_ref[...].astype(jnp.float32)
    o_ref[...] = _layernorm_f32(x, g, b, eps).astype(o_ref.dtype)


def layernorm_rows(x2d, gamma, beta, *, eps=_EPS, tm=256):
    n, dim = x2d.shape
    tm = max(8, min(tm, _round_up(n, 8)))
    grid = (pl.cdiv(n, tm),)
    return pl.pallas_call(
        functools.partial(_ln_kernel, eps=eps),
        out_shape=jax.ShapeDtypeStruct((n, dim), x2d.dtype),
        grid_spec=pltpu.PrefetchScalarGridSpec(
            num_scalar_prefetch=0,
            grid=grid,
            in_specs=[_row_spec(tm, dim),
                      _const_spec((1, dim)), _const_spec((1, dim))],
            out_specs=_row_spec(tm, dim),
        ),
        compiler_params=pltpu.CompilerParams(
            dimension_semantics=("parallel",),
            vmem_limit_bytes=_VMEM_LIMIT),
    )(x2d, gamma.reshape(1, dim), beta.reshape(1, dim))


# --------------------- full Transformer forward -------------------------------
def transformer_forward(x, params, heads, *, eps=_EPS, tm=256):
    """Pallas equivalent of Transformer.forward(x) with att_mask=None,
    return_att=False.  Returns (final_layernorm(x), ())."""
    b, s, dim = x.shape
    n = b * s
    x2d = x.reshape(n, dim)

    for layer in params["layers"]:
        a = layer["attn"]
        inner = a["out_proj"].shape[0]
        dh = inner // heads

        # Attention block: x = to_out(MHA(chunk(to_qkv(LN(x))))) + x
        qkv = ln_qkv_proj(x2d, a["ln_g"], a["ln_b"], a["to_qkv"], a["in_proj"],
                          eps=eps, tm=tm)
        q, k, v = qkv[:, :inner], qkv[:, inner:2 * inner], qkv[:, 2 * inner:]

        def split_heads(t):
            return (t.reshape(b, s, heads, dh)
                     .transpose(0, 2, 1, 3)
                     .reshape(b * heads, s, dh))

        ctx = mha_core(split_heads(q), split_heads(k), split_heads(v),
                       scale=float(dh) ** -0.5)
        ctx2d = (ctx.reshape(b, heads, s, dh)
                    .transpose(0, 2, 1, 3)
                    .reshape(n, inner))
        x2d = attn_out_proj(ctx2d, a["out_proj"], a["to_out"], x2d, tm=tm)

        # FeedForward block: x = FFN(x) + x  (residual fused in-kernel)
        f = layer["ff"]
        x2d = ffn_block(x2d, f["ln_g"], f["ln_b"], f["w1"], f["b1"],
                        f["w2"], f["b2"], eps=eps, tm=tm)

    y2d = layernorm_rows(x2d, params["final_g"], params["final_b"], eps=eps, tm=tm)
    # TODO(synk): att_mask and return_att=True (per-head attention weights) are
    # not implemented; only the default att_mask=None, return_att=False path.
    return y2d.reshape(b, s, dim), ()


# --------------------- pure-JAX reference (PyTorch semantics) -----------------
def _ln_ref(x, g, b, eps=_EPS):
    mean = jnp.mean(x, axis=-1, keepdims=True)
    var = jnp.mean((x - mean) ** 2, axis=-1, keepdims=True)
    return (x - mean) * jax.lax.rsqrt(var + eps) * g + b


def _linear_ref(x, w):
    return jnp.einsum("...i,oi->...o", x, w, precision=jax.lax.Precision.HIGHEST)


def transformer_reference(x, params, heads, eps=_EPS):
    b, s, dim = x.shape
    hp = jax.lax.Precision.HIGHEST
    for layer in params["layers"]:
        a = layer["attn"]
        inner = a["out_proj"].shape[0]
        dh = inner // heads
        xn = _ln_ref(x, a["ln_g"], a["ln_b"], eps)
        q0, k0, v0 = jnp.split(_linear_ref(xn, a["to_qkv"]), 3, axis=-1)
        wq, wk, wv = jnp.split(a["in_proj"], 3, axis=0)
        q, k, v = _linear_ref(q0, wq), _linear_ref(k0, wk), _linear_ref(v0, wv)

        def heads_first(t):
            return t.reshape(b, s, heads, dh).transpose(0, 2, 1, 3)

        qh, kh, vh = heads_first(q), heads_first(k), heads_first(v)
        scores = jnp.einsum("bhqd,bhkd->bhqk", qh, kh, precision=hp) * (float(dh) ** -0.5)
        p = jax.nn.softmax(scores, axis=-1)
        ctx = jnp.einsum("bhqk,bhkd->bhqd", p, vh, precision=hp)
        ctx = ctx.transpose(0, 2, 1, 3).reshape(b, s, inner)
        o = _linear_ref(_linear_ref(ctx, a["out_proj"]), a["to_out"])
        x = o + x

        f = layer["ff"]
        xn = _ln_ref(x, f["ln_g"], f["ln_b"], eps)
        h = _linear_ref(xn, f["w1"]) + f["b1"]
        h = 0.5 * h * (1.0 + jax.lax.erf(h * jnp.float32(0.7071067811865476)))
        x = _linear_ref(h, f["w2"]) + f["b2"] + x
    return _ln_ref(x, params["final_g"], params["final_b"], eps)


# --------------------- parameter init -----------------------------------------
def init_params(key, dim, depth, heads, dim_head, mlp_dim):
    inner = heads * dim_head
    keys = iter(jax.random.split(key, depth * 12 + 2))
    nxt = lambda: next(keys)
    nrm = lambda k, shape, s=0.05: s * jax.random.normal(k, shape, jnp.float32)
    layers = []
    for _ in range(depth):
        attn = dict(
            ln_g=1.0 + nrm(nxt(), (dim,), 0.1),
            ln_b=nrm(nxt(), (dim,), 0.1),
            to_qkv=nrm(nxt(), (3 * inner, dim)),
            in_proj=nrm(nxt(), (3 * inner, inner)),
            out_proj=nrm(nxt(), (inner, inner)),
            to_out=nrm(nxt(), (dim, inner)),
        )
        ff = dict(
            ln_g=1.0 + nrm(nxt(), (dim,), 0.1),
            ln_b=nrm(nxt(), (dim,), 0.1),
            w1=nrm(nxt(), (mlp_dim, dim)),
            b1=nrm(nxt(), (mlp_dim,)),
            w2=nrm(nxt(), (dim, mlp_dim)),
            b2=nrm(nxt(), (dim,)),
        )
        layers.append({"attn": attn, "ff": ff})
    return {"layers": layers,
            "final_g": 1.0 + nrm(nxt(), (dim,), 0.1),
            "final_b": nrm(nxt(), (dim,), 0.1)}


if __name__ == "__main__":
    # small but lane-dense demo shapes (dim, inner, mlp all multiples of 128)
    batch, seq = 2, 16
    dim, depth, heads, dim_head, mlp_dim = 128, 2, 4, 32, 256

    key = jax.random.PRNGKey(0)
    kx, kp = jax.random.split(key)
    x = jax.random.normal(kx, (batch, seq, dim), dtype=jnp.float32)
    params = init_params(kp, dim, depth, heads, dim_head, mlp_dim)

    out, att_maps = transformer_forward(x, params, heads)
    out = jax.block_until_ready(out)

    ref = transformer_reference(x, params, heads)
    assert out.shape == (batch, seq, dim)
    assert att_maps == ()
    max_err = float(jnp.max(jnp.abs(out - ref)))
    assert jnp.allclose(out, ref, atol=2e-3, rtol=2e-3), (
        f"mismatch vs reference: max abs err = {max_err}")

    print("KERNEL_OK")
</pallas_src>

<mosaic_0001>
module attributes {stable_mosaic.version = 11 : i64} {
  func.func @_ln_qkv_kernel(%arg0: i32, %arg1: memref<32x128xf32, #tpu.memory_space<vmem>>, %arg2: memref<1x128xf32, #tpu.memory_space<vmem>>, %arg3: memref<1x128xf32, #tpu.memory_space<vmem>>, %arg4: memref<128x384xf32, #tpu.memory_space<vmem>>, %arg5: memref<128x128xf32, #tpu.memory_space<vmem>>, %arg6: memref<128x128xf32, #tpu.memory_space<vmem>>, %arg7: memref<128x128xf32, #tpu.memory_space<vmem>>, %arg8: memref<32x384xf32, #tpu.memory_space<vmem>>) attributes {dimension_semantics = [#tpu.dimension_semantics<parallel>], iteration_bounds = array<i64: 1>, scalar_prefetch = 0 : i64, scratch_operands = 0 : i64, tpu.core_type = #tpu.core_type<tc>, window_params = [{transform_indices = @transform_0, window_bounds = array<i64: 32, 128>}, {pipeline_mode = #tpu.pipeline_mode<synchronous>, transform_indices = @transform_1, window_bounds = array<i64: 1, 128>}, {pipeline_mode = #tpu.pipeline_mode<synchronous>, transform_indices = @transform_2, window_bounds = array<i64: 1, 128>}, {pipeline_mode = #tpu.pipeline_mode<synchronous>, transform_indices = @transform_3, window_bounds = array<i64: 128, 384>}, {pipeline_mode = #tpu.pipeline_mode<synchronous>, transform_indices = @transform_4, window_bounds = array<i64: 128, 128>}, {pipeline_mode = #tpu.pipeline_mode<synchronous>, transform_indices = @transform_5, window_bounds = array<i64: 128, 128>}, {pipeline_mode = #tpu.pipeline_mode<synchronous>, transform_indices = @transform_6, window_bounds = array<i64: 128, 128>}, {transform_indices = @transform_7, window_bounds = array<i64: 32, 384>}]} {
    %c0 = arith.constant 0 : index
    %c0_0 = arith.constant 0 : index
    %0 = vector.load %arg1[%c0, %c0_0] : memref<32x128xf32, #tpu.memory_space<vmem>>, vector<32x128xf32>
    %c0_1 = arith.constant 0 : index
    %c0_2 = arith.constant 0 : index
    %1 = vector.load %arg2[%c0_1, %c0_2] : memref<1x128xf32, #tpu.memory_space<vmem>>, vector<1x128xf32>
    %c0_3 = arith.constant 0 : index
    %c0_4 = arith.constant 0 : index
    %2 = vector.load %arg3[%c0_3, %c0_4] : memref<1x128xf32, #tpu.memory_space<vmem>>, vector<1x128xf32>
    %cst = arith.constant dense<0.000000e+00> : vector<32xf32>
    %3 = vector.multi_reduction <add>, %0, %cst [1] : vector<32x128xf32> to vector<32xf32>
    %4 = vector.shape_cast %3 : vector<32xf32> to vector<32x1xf32>
    %cst_5 = arith.constant 1.280000e+02 : f32
    %5 = vector.broadcast %cst_5 : f32 to vector<32x1xf32>
    %6 = arith.divf %4, %5 : vector<32x1xf32>
    %7 = vector.broadcast %6 : vector<32x1xf32> to vector<32x128xf32>
    %8 = arith.subf %0, %7 : vector<32x128xf32>
    %9 = arith.mulf %8, %8 : vector<32x128xf32>
    %cst_6 = arith.constant dense<0.000000e+00> : vector<32xf32>
    %10 = vector.multi_reduction <add>, %9, %cst_6 [1] : vector<32x128xf32> to vector<32xf32>
    %11 = vector.shape_cast %10 : vector<32xf32> to vector<32x1xf32>
    %cst_7 = arith.constant 1.280000e+02 : f32
    %12 = vector.broadcast %cst_7 : f32 to vector<32x1xf32>
    %13 = arith.divf %11, %12 : vector<32x1xf32>
    %cst_8 = arith.constant 9.99999974E-6 : f32
    %14 = vector.broadcast %cst_8 : f32 to vector<32x1xf32>
    %15 = arith.addf %13, %14 : vector<32x1xf32>
    %16 = math.rsqrt %15 : vector<32x1xf32>
    %17 = vector.broadcast %16 : vector<32x1xf32> to vector<32x128xf32>
    %18 = arith.mulf %8, %17 : vector<32x128xf32>
    %19 = vector.broadcast %1 : vector<1x128xf32> to vector<32x128xf32>
    %20 = arith.mulf %18, %19 : vector<32x128xf32>
    %21 = vector.broadcast %2 : vector<1x128xf32> to vector<32x128xf32>
    %22 = arith.addf %20, %21 : vector<32x128xf32>
    %c0_9 = arith.constant 0 : index
    %c0_10 = arith.constant 0 : index
    %23 = vector.load %arg4[%c0_9, %c0_10] : memref<128x384xf32, #tpu.memory_space<vmem>>, vector<128x384xf32>
    %cst_11 = arith.constant dense<0.000000e+00> : vector<32x384xf32>
    %24 = tpu.matmul %22, %23, %cst_11 {dimension_numbers = #tpu.dot_dimension_numbers<[1], [0], [0], [1], [0, 0, 1, 1], [], []>} : vector<32x128xf32>, vector<128x384xf32>, vector<32x384xf32> -> vector<32x384xf32>
    %25 = vector.extract_strided_slice %24 {offsets = [0, 0], sizes = [32, 128], strides = [1, 1]} : vector<32x384xf32> to vector<32x128xf32>
    %26 = vector.extract_strided_slice %24 {offsets = [0, 128], sizes = [32, 128], strides = [1, 1]} : vector<32x384xf32> to vector<32x128xf32>
    %27 = vector.extract_strided_slice %24 {offsets = [0, 256], sizes = [32, 128], strides = [1, 1]} : vector<32x384xf32> to vector<32x128xf32>
    %c0_12 = arith.constant 0 : index
    %c0_13 = arith.constant 0 : index
    %28 = vector.load %arg5[%c0_12, %c0_13] : memref<128x128xf32, #tpu.memory_space<vmem>>, vector<128x128xf32>
    %cst_14 = arith.constant dense<0.000000e+00> : vector<32x128xf32>
    %29 = tpu.matmul %25, %28, %cst_14 {dimension_numbers = #tpu.dot_dimension_numbers<[1], [0], [0], [1], [0, 0, 1, 1], [], []>} : vector<32x128xf32>, vector<128x128xf32>, vector<32x128xf32> -> vector<32x128xf32>
    %c0_15 = arith.constant 0 : index
    %c0_16 = arith.constant 0 : index
    %30 = vector.load %arg6[%c0_15, %c0_16] : memref<128x128xf32, #tpu.memory_space<vmem>>, vector<128x128xf32>
    %cst_17 = arith.constant dense<0.000000e+00> : vector<32x128xf32>
    %31 = tpu.matmul %26, %30, %cst_17 {dimension_numbers = #tpu.dot_dimension_numbers<[1], [0], [0], [1], [0, 0, 1, 1], [], []>} : vector<32x128xf32>, vector<128x128xf32>, vector<32x128xf32> -> vector<32x128xf32>
    %c0_18 = arith.constant 0 : index
    %c0_19 = arith.constant 0 : index
    %32 = vector.load %arg7[%c0_18, %c0_19] : memref<128x128xf32, #tpu.memory_space<vmem>>, vector<128x128xf32>
    %cst_20 = arith.constant dense<0.000000e+00> : vector<32x128xf32>
    %33 = tpu.matmul %27, %32, %cst_20 {dimension_numbers = #tpu.dot_dimension_numbers<[1], [0], [0], [1], [0, 0, 1, 1], [], []>} : vector<32x128xf32>, vector<128x128xf32>, vector<32x128xf32> -> vector<32x128xf32>
    %34 = tpu.concatenate %29, %31, %33 in 1 : vector<32x128xf32>, vector<32x128xf32>, vector<32x128xf32> -> vector<32x384xf32>
    %c0_21 = arith.constant 0 : index
    %c0_22 = arith.constant 0 : index
    %35 = vector.load %arg8[%c0_21, %c0_22] : memref<32x384xf32, #tpu.memory_space<vmem>>, vector<32x384xf32>
    tpu.vector_store %arg8[%c0_21, %c0_22], %34 {strides = array<i32>} : memref<32x384xf32, #tpu.memory_space<vmem>>, vector<32x384xf32>,
    return
  }
  func.func @transform_0(%arg0: i32) -> (i32, i32) {
    %c0_i32 = arith.constant 0 : i32
    %c0_i32_0 = arith.constant 0 : i32
    return %arg0, %c0_i32 : i32, i32
  }
  func.func @transform_1(%arg0: i32) -> (i32, i32) {
    %c0_i32 = arith.constant 0 : i32
    %c0_i32_0 = arith.constant 0 : i32
    %c0_i32_1 = arith.constant 0 : i32
    return %c0_i32, %c0_i32_0 : i32, i32
  }
  func.func @transform_2(%arg0: i32) -> (i32, i32) {
    %c0_i32 = arith.constant 0 : i32
    %c0_i32_0 = arith.constant 0 : i32
    %c0_i32_1 = arith.constant 0 : i32
    return %c0_i32, %c0_i32_0 : i32, i32
  }
  func.func @transform_3(%arg0: i32) -> (i32, i32) {
    %c0_i32 = arith.constant 0 : i32
    %c0_i32_0 = arith.constant 0 : i32
    %c0_i32_1 = arith.constant 0 : i32
    return %c0_i32, %c0_i32_0 : i32, i32
  }
  func.func @transform_4(%arg0: i32) -> (i32, i32) {
    %c0_i32 = arith.constant 0 : i32
    %c0_i32_0 = arith.constant 0 : i32
    %c0_i32_1 = arith.constant 0 : i32
    return %c0_i32, %c0_i32_0 : i32, i32
  }
  func.func @transform_5(%arg0: i32) -> (i32, i32) {
    %c0_i32 = arith.constant 0 : i32
    %c0_i32_0 = arith.constant 0 : i32
    %c0_i32_1 = arith.constant 0 : i32
    return %c0_i32, %c0_i32_0 : i32, i32
  }
  func.func @transform_6(%arg0: i32) -> (i32, i32) {
    %c0_i32 = arith.constant 0 : i32
    %c0_i32_0 = arith.constant 0 : i32
    %c0_i32_1 = arith.constant 0 : i32
    return %c0_i32, %c0_i32_0 : i32, i32
  }
  func.func @transform_7(%arg0: i32) -> (i32, i32) {
    %c0_i32 = arith.constant 0 : i32
    %c0_i32_0 = arith.constant 0 : i32
    return %arg0, %c0_i32 : i32, i32
  }
}

</mosaic_0001>

<llo_original>
// kernel: tpu_custom_call.1
$region0: #{tpu_custom_call.1}
  #allocation0 [shape = 'u32[]', space=smem, size = 0x4, offset = 0x4, fixed_abs, tag = 'smem constant byte address 0x4 - core index']
  #allocation1 [shape = 'u32[144,128]{1,0:T(1,128)}', space=vmem, size = 0x12000, scoped, tag = 'internal scratch']
  %s0 = inlined_call_operand.hbm [shape: f32[32,128], index: 0, kind: input, shape index: {}]
  %s1 = inlined_call_operand.vmem [shape: f32[1,128], index: 1, kind: input, shape index: {}]
  %s2 = inlined_call_operand.vmem [shape: f32[1,128], index: 2, kind: input, shape index: {}]
  %s3 = inlined_call_operand.hbm [shape: f32[128,384], index: 3, kind: input, shape index: {}]
  %s4 = inlined_call_operand.hbm [shape: f32[128,128], index: 4, kind: input, shape index: {}]
  %s5 = inlined_call_operand.hbm [shape: f32[128,128], index: 5, kind: input, shape index: {}]
  %s6 = inlined_call_operand.hbm [shape: f32[128,128], index: 6, kind: input, shape index: {}]
  %s7 = inlined_call_operand.hbm [shape: f32[32,384], index: 7, kind: output, shape index: {}]
  %s8 = sld [smem:[#allocation0]]
  $region58: #{tpu_custom_call.1} parent=0
    _
  %s10 = ssub.s32 1, %s8
  %s11 = scalar_select 0, %s10, %s8
  $region1: #{tpu_custom_call.1} parent=0
    #allocation2 [shape = 'u8[16384]{0}', space=vmem, size = 0x4000, scoped, tag = 'input window, operand 0, single buffered']
    #allocation3 [shape = 's32[1]{0}', space=sflag, size = 0x4, scoped, tag = 'scoped memory for tpu_custom_call.1']
    #allocation4 [shape = 's32[1]{0}', space=sflag, size = 0x4, scoped, tag = 'scoped memory for tpu_custom_call.1']
    #allocation5 [shape = 'u8[196608]{0}', space=vmem, size = 0x30000, scoped, tag = 'input window, operand 3, single buffered']
    #allocation6 [shape = 's32[1]{0}', space=sflag, size = 0x4, scoped, tag = 'scoped memory for tpu_custom_call.1']
    #allocation7 [shape = 'u8[65536]{0}', space=vmem, size = 0x10000, scoped, tag = 'input window, operand 4, single buffered']
    #allocation8 [shape = 'u8[65536]{0}', space=vmem, size = 0x10000, scoped, tag = 'input window, operand 5, single buffered']
    #allocation9 [shape = 's32[1]{0}', space=sflag, size = 0x4, scoped, tag = 'scoped memory for tpu_custom_call.1']
    #allocation10 [shape = 'u8[65536]{0}', space=vmem, size = 0x10000, scoped, tag = 'input window, operand 6, single buffered']
    #allocation11 [shape = 'u8[49152]{0}', space=vmem, size = 0xc000, scoped, tag = 'output window, operand 0, single buffered']
    %12 = vsyncpa [#allocation3], 0
    %13 = vsyncpa [#allocation6], 0
    %14 = vsyncpa [#allocation9], 0
    %15 = vsyncpa [#allocation4], 0
    // Predicated region
    $region2: #{tpu_custom_call.1} parent=1 // pred_check
      _
    $region3: #{tpu_custom_call.1} parent=1 // pred_check_branch
      %17 = sbr.rel (0) target = $region5
    $region4: #{tpu_custom_call.1} parent=1 // pred_region
      %s19 = ssub.s32 512, 512
      %20 = vsyncadd [#allocation3], %s19
      %s21 = sshll.u32 [#allocation2], 4
      %s22 = int_to_ptr.vmem [resolvable:$true] %s21
      %27 = dma.hbm_to_vmem [thread:$0]  %s0, 512, %s22, [#allocation3], 128, 128, 8
    $region5: #{tpu_custom_call.1} parent=1 // pred_fallthru
      _
    // Predicated region
    $region6: #{tpu_custom_call.1} parent=1 // pred_check
      _
    $region7: #{tpu_custom_call.1} parent=1 // pred_check_branch
      %29 = sbr.rel (0) target = $region9
    $region8: #{tpu_custom_call.1} parent=1 // pred_region
      _
    $region9: #{tpu_custom_call.1} parent=1 // pred_fallthru
      _
    // Predicated region
    $region10: #{tpu_custom_call.1} parent=1 // pred_check
      _
    $region11: #{tpu_custom_call.1} parent=1 // pred_check_branch
      %31 = sbr.rel (0) target = $region13
    $region12: #{tpu_custom_call.1} parent=1 // pred_region
      _
    $region13: #{tpu_custom_call.1} parent=1 // pred_fallthru
      _
    // Predicated region
    $region14: #{tpu_custom_call.1} parent=1 // pred_check
      _
    $region15: #{tpu_custom_call.1} parent=1 // pred_check_branch
      %33 = sbr.rel (0) target = $region17
    $region16: #{tpu_custom_call.1} parent=1 // pred_region
      %s35 = ssub.s32 6144, 6144
      %36 = vsyncadd [#allocation6], %s35
      %s37 = sshll.u32 [#allocation5], 4
      %s38 = int_to_ptr.vmem [resolvable:$true] %s37
      %43 = dma.hbm_to_vmem [thread:$0]  %s3, 6144, %s38, [#allocation6], 384, 384, 24
    $region17: #{tpu_custom_call.1} parent=1 // pred_fallthru
      _
    // Predicated region
    $region18: #{tpu_custom_call.1} parent=1 // pred_check
      _
    $region19: #{tpu_custom_call.1} parent=1 // pred_check_branch
      %45 = sbr.rel (0) target = $region21
    $region20: #{tpu_custom_call.1} parent=1 // pred_region
      %s47 = ssub.s32 2048, 2048
      %48 = vsyncadd [#allocation6], %s47
      %s49 = sshll.u32 [#allocation7], 4
      %s50 = int_to_ptr.vmem [resolvable:$true] %s49
      %55 = dma.hbm_to_vmem [thread:$0]  %s4, 2048, %s50, [#allocation6], 128, 128, 8
    $region21: #{tpu_custom_call.1} parent=1 // pred_fallthru
      _
    // Predicated region
    $region22: #{tpu_custom_call.1} parent=1 // pred_check
      _
    $region23: #{tpu_custom_call.1} parent=1 // pred_check_branch
      %57 = sbr.rel (0) target = $region25
    $region24: #{tpu_custom_call.1} parent=1 // pred_region
      %s59 = ssub.s32 2048, 2048
      %60 = vsyncadd [#allocation9], %s59
      %s61 = sshll.u32 [#allocation8], 4
      %s62 = int_to_ptr.vmem [resolvable:$true] %s61
      %67 = dma.hbm_to_vmem [thread:$0]  %s5, 2048, %s62, [#allocation9], 128, 128, 8
    $region25: #{tpu_custom_call.1} parent=1 // pred_fallthru
      _
    // Predicated region
    $region26: #{tpu_custom_call.1} parent=1 // pred_check
      _
    $region27: #{tpu_custom_call.1} parent=1 // pred_check_branch
      %69 = sbr.rel (0) target = $region29
    $region28: #{tpu_custom_call.1} parent=1 // pred_region
      %s71 = ssub.s32 2048, 2048
      %72 = vsyncadd [#allocation9], %s71
      %s73 = sshll.u32 [#allocation10], 4
      %s74 = int_to_ptr.vmem [resolvable:$true] %s73
      %79 = dma.hbm_to_vmem [thread:$0]  %s6, 2048, %s74, [#allocation9], 128, 128, 8
    $region29: #{tpu_custom_call.1} parent=1 // pred_fallthru
      _
    // Predicated region
    $region30: #{tpu_custom_call.1} parent=1 // pred_check
      _
    $region31: #{tpu_custom_call.1} parent=1 // pred_check_branch
      %81 = sbr.rel (0) target = $region33
    $region32: #{tpu_custom_call.1} parent=1 // pred_region
      %82 = dma.done [#allocation3], 512
    $region33: #{tpu_custom_call.1} parent=1 // pred_fallthru
      _
    // Predicated region
    $region34: #{tpu_custom_call.1} parent=1 // pred_check
      _
    $region35: #{tpu_custom_call.1} parent=1 // pred_check_branch
      %84 = sbr.rel (0) target = $region37
    $region36: #{tpu_custom_call.1} parent=1 // pred_region
      %85 = dma.done [#allocation6], 6144
    $region37: #{tpu_custom_call.1} parent=1 // pred_fallthru
      _
    // Predicated region
    $region38: #{tpu_custom_call.1} parent=1 // pred_check
      _
    $region39: #{tpu_custom_call.1} parent=1 // pred_check_branch
      %87 = sbr.rel (0) target = $region41
    $region40: #{tpu_custom_call.1} parent=1 // pred_region
      %88 = dma.done [#allocation6], 2048
    $region41: #{tpu_custom_call.1} parent=1 // pred_fallthru
      _
    // Predicated region
    $region42: #{tpu_custom_call.1} parent=1 // pred_check
      _
    $region43: #{tpu_custom_call.1} parent=1 // pred_check_branch
      %90 = sbr.rel (0) target = $region45
    $region44: #{tpu_custom_call.1} parent=1 // pred_region
      %91 = dma.done [#allocation9], 2048
    $region45: #{tpu_custom_call.1} parent=1 // pred_fallthru
      _
    // Predicated region
    $region46: #{tpu_custom_call.1} parent=1 // pred_check
      _
    $region47: #{tpu_custom_call.1} parent=1 // pred_check_branch
      %93 = sbr.rel (0) target = $region49
    $region48: #{tpu_custom_call.1} parent=1 // pred_region
      %94 = dma.done [#allocation9], 2048
    $region49: #{tpu_custom_call.1} parent=1 // pred_fallthru
      _
    %v95 = vld [vmem:[#allocation2] sm:$0xff]
    %v96 = vld [vmem:[#allocation2 + $0x8] sm:$0xff]
    %v97 = vld [vmem:[#allocation2 + $0x10] sm:$0xff]
    %v98 = vld [vmem:[#allocation2 + $0x18] sm:$0xff]
    %v99 = vld [vmem:[%s1] sm:$0x1]
    %v100 = vld [vmem:[%s2] sm:$0x1]
    %101 = vadd.xlane.f32.xlu0 %v95
    %v102 = vpop.xlane.xlu0 %101
    %103 = vadd.xlane.f32.xlu0 %v96
    %v104 = vpop.xlane.xlu0 %103
    %105 = vadd.xlane.f32.xlu0 %v97
    %v106 = vpop.xlane.xlu0 %105
    %107 = vadd.xlane.f32.xlu0 %v98
    %v108 = vpop.xlane.xlu0 %107
    %v109 = vrcp.pop 128.0
    %v110 = vmul.f32 %v102, %v109
    %v111 = vmul.f32 %v104, %v109
    %v112 = vmul.f32 %v106, %v109
    %v113 = vmul.f32 %v108, %v109
    %v114 = vsub.f32 %v95, %v110
    %v115 = vsub.f32 %v96, %v111
    %v116 = vsub.f32 %v97, %v112
    %v117 = vsub.f32 %v98, %v113
    %v118 = vmul.f32 %v114, %v114
    %v119 = vmul.f32 %v115, %v115
    %v120 = vmul.f32 %v116, %v116
    %v121 = vmul.f32 %v117, %v117
    %122 = vadd.xlane.f32.xlu0 %v118
    %v123 = vpop.xlane.xlu0 %122
    %124 = vadd.xlane.f32.xlu0 %v119
    %v125 = vpop.xlane.xlu0 %124
    %126 = vadd.xlane.f32.xlu0 %v120
    %v127 = vpop.xlane.xlu0 %126
    %128 = vadd.xlane.f32.xlu0 %v121
    %v129 = vpop.xlane.xlu0 %128
    %v130 = vmul.f32 %v123, %v109
    %v131 = vmul.f32 %v125, %v109
    %v132 = vmul.f32 %v127, %v109
    %v133 = vmul.f32 %v129, %v109
    %v134 = vadd.f32 %v130, 1e-05
    %v135 = vadd.f32 %v131, 1e-05
    %v136 = vadd.f32 %v132, 1e-05
    %v137 = vadd.f32 %v133, 1e-05
    %v138 = vrsqrt.pop %v134
    %v139 = vrsqrt.pop %v135
    %v140 = vrsqrt.pop %v136
    %v141 = vrsqrt.pop %v137
    %v142 = vmul.f32 %v114, %v138
    %v143 = vmul.f32 %v115, %v139
    %v144 = vmul.f32 %v116, %v140
    %v145 = vmul.f32 %v117, %v141
    %v147 = vlaneseq
    %v148 = vshrl.u32 %v147, 7
    %v149 = vsub.s32 0, %v148
    %v150 = vrot.slane %v99, %v149
    %v152 = vmul.f32 %v142, %v150
    %v153 = vmul.f32 %v143, %v150
    %v154 = vmul.f32 %v144, %v150
    %v155 = vmul.f32 %v145, %v150
    %v157 = vlaneseq
    %v158 = vshrl.u32 %v157, 7
    %v159 = vsub.s32 0, %v158
    %v160 = vrot.slane %v100, %v159
    %v162 = vadd.f32 %v152, %v160
    %v163 = vadd.f32 %v153, %v160
    %v164 = vadd.f32 %v154, %v160
    %v165 = vadd.f32 %v155, %v160
    %v166 = vld [vmem:[#allocation5] sm:$0xff]
    %v167 = vld [vmem:[#allocation5 + $0x8] sm:$0xff]
    %v168 = vld [vmem:[#allocation5 + $0x10] sm:$0xff]
    %v169 = vld [vmem:[#allocation5 + $0x18] sm:$0xff]
    %v170 = vld [vmem:[#allocation5 + $0x20] sm:$0xff]
    %v171 = vld [vmem:[#allocation5 + $0x28] sm:$0xff]
    %v172 = vld [vmem:[#allocation5 + $0x30] sm:$0xff]
    %v173 = vld [vmem:[#allocation5 + $0x38] sm:$0xff]
    %v174 = vld [vmem:[#allocation5 + $0x40] sm:$0xff]
    %v175 = vld [vmem:[#allocation5 + $0x48] sm:$0xff]
    %v176 = vld [vmem:[#allocation5 + $0x50] sm:$0xff]
    %v177 = vld [vmem:[#allocation5 + $0x58] sm:$0xff]
    %v178 = vld [vmem:[#allocation5 + $0x60] sm:$0xff]
    %v179 = vld [vmem:[#allocation5 + $0x68] sm:$0xff]
    %v180 = vld [vmem:[#allocation5 + $0x70] sm:$0xff]
    %v181 = vld [vmem:[#allocation5 + $0x78] sm:$0xff]
    %v182 = vld [vmem:[#allocation5 + $0x80] sm:$0xff]
    %v183 = vld [vmem:[#allocation5 + $0x88] sm:$0xff]
    %v184 = vld [vmem:[#allocation5 + $0x90] sm:$0xff]
    %v185 = vld [vmem:[#allocation5 + $0x98] sm:$0xff]
    %v186 = vld [vmem:[#allocation5 + $0xa0] sm:$0xff]
    %v187 = vld [vmem:[#allocation5 + $0xa8] sm:$0xff]
    %v188 = vld [vmem:[#allocation5 + $0xb0] sm:$0xff]
    %v189 = vld [vmem:[#allocation5 + $0xb8] sm:$0xff]
    %v190 = vld [vmem:[#allocation5 + $0xc0] sm:$0xff]
    %v191 = vld [vmem:[#allocation5 + $0xc8] sm:$0xff]
    %v192 = vld [vmem:[#allocation5 + $0xd0] sm:$0xff]
    %v193 = vld [vmem:[#allocation5 + $0xd8] sm:$0xff]
    %v194 = vld [vmem:[#allocation5 + $0xe0] sm:$0xff]
    %v195 = vld [vmem:[#allocation5 + $0xe8] sm:$0xff]
    %v196 = vld [vmem:[#allocation5 + $0xf0] sm:$0xff]
    %v197 = vld [vmem:[#allocation5 + $0xf8] sm:$0xff]
    %v198 = vld [vmem:[#allocation5 + $0x100] sm:$0xff]
    %v199 = vld [vmem:[#allocation5 + $0x108] sm:$0xff]
    %v200 = vld [vmem:[#allocation5 + $0x110] sm:$0xff]
    %v201 = vld [vmem:[#allocation5 + $0x118] sm:$0xff]
    %v202 = vld [vmem:[#allocation5 + $0x120] sm:$0xff]
    %v203 = vld [vmem:[#allocation5 + $0x128] sm:$0xff]
    %v204 = vld [vmem:[#allocation5 + $0x130] sm:$0xff]
    %v205 = vld [vmem:[#allocation5 + $0x138] sm:$0xff]
    %v206 = vld [vmem:[#allocation5 + $0x140] sm:$0xff]
    %v207 = vld [vmem:[#allocation5 + $0x148] sm:$0xff]
    %v208 = vld [vmem:[#allocation5 + $0x150] sm:$0xff]
    %v209 = vld [vmem:[#allocation5 + $0x158] sm:$0xff]
    %v210 = vld [vmem:[#allocation5 + $0x160] sm:$0xff]
    %v211 = vld [vmem:[#allocation5 + $0x168] sm:$0xff]
    %v212 = vld [vmem:[#allocation5 + $0x170] sm:$0xff]
    %v213 = vld [vmem:[#allocation5 + $0x178] sm:$0xff]
    %214 = vmatprep.subr.mxu0 %v167
    %215 = vmatpush1.msra.mxu0 %v166
    %216 = vmatprep.subr.mxu0 %v170
    %217 = vmatpush1.msra.mxu0 %v169
    %218 = vmatprep.subr.mxu0 %v173
    %219 = vmatpush1.msra.mxu0 %v172
    %220 = vmatprep.subr.mxu0 %v176
    %221 = vmatpush1.msra.mxu0 %v175
    %222 = vmatprep.subr.mxu0 %v179
    %223 = vmatpush1.msra.mxu0 %v178
    %224 = vmatprep.subr.mxu0 %v182
    %225 = vmatpush1.msra.mxu0 %v181
    %226 = vmatprep.subr.mxu0 %v185
    %227 = vmatpush1.msra.mxu0 %v184
    %228 = vmatprep.subr.mxu0 %v188
    %229 = vmatpush1.msra.mxu0 %v187
    %230 = vmatprep.subr.mxu0 %v191
    %231 = vmatpush1.msra.mxu0 %v190
    %232 = vmatprep.subr.mxu0 %v194
    %233 = vmatpush1.msra.mxu0 %v193
    %234 = vmatprep.subr.mxu0 %v197
    %235 = vmatpush1.msra.mxu0 %v196
    %236 = vmatprep.subr.mxu0 %v200
    %237 = vmatpush1.msra.mxu0 %v199
    %238 = vmatprep.subr.mxu0 %v203
    %239 = vmatpush1.msra.mxu0 %v202
    %240 = vmatprep.subr.mxu0 %v206
    %241 = vmatpush1.msra.mxu0 %v205
    %242 = vmatprep.subr.mxu0 %v209
    %243 = vmatpush1.msra.mxu0 %v208
    %244 = vmatprep.subr.mxu0 %v212
    %245 = vmatpush1.msra.mxu0 %v211
    %246 = vmatprep.subr.mxu0 0.0
    %247 = vmatpush1.msra.mxu0 0.0
    %248 = vmatprep.subr.mxu0 0.0
    %249 = vmatpush1.msra.mxu0 0.0
    %250 = vmatprep.subr.mxu0 0.0
    %251 = vmatpush1.msra.mxu0 0.0
    %252 = vmatprep.subr.mxu0 0.0
    %253 = vmatpush1.msra.mxu0 0.0
    %254 = vmatprep.subr.mxu0 0.0
    %255 = vmatpush1.msra.mxu0 0.0
    %256 = vmatprep.subr.mxu0 0.0
    %257 = vmatpush1.msra.mxu0 0.0
    %258 = vmatprep.subr.mxu0 0.0
    %259 = vmatpush1.msra.mxu0 0.0
    %260 = vmatprep.subr.mxu0 0.0
    %261 = vmatpush1.msra.mxu0 0.0
    %262 = vmatprep.subr.mxu0 0.0
    %263 = vmatpush1.msra.mxu0 0.0
    %264 = vmatprep.subr.mxu0 0.0
    %265 = vmatpush1.msra.mxu0 0.0
    %266 = vmatprep.subr.mxu0 0.0
    %267 = vmatpush1.msra.mxu0 0.0
    %268 = vmatprep.subr.mxu0 0.0
    %269 = vmatpush1.msra.mxu0 0.0
    %270 = vmatprep.subr.mxu0 0.0
    %271 = vmatpush1.msra.mxu0 0.0
    %272 = vmatprep.subr.mxu0 0.0
    %273 = vmatpush1.msra.mxu0 0.0
    %274 = vmatprep.subr.mxu0 0.0
    %275 = vmatpush1.msra.mxu0 0.0
    %276 = vmatprep.subr.mxu0 0.0
    %277 = vmatpush1.msra.mxu0 0.0
    %278 = vmatprep.mubr.f32.mxu0 0.0
    %279 = vmatmul.mubr.f32.gmra.mrb[0].mxu0 %v162
    %v280 = vpop.f32.mrb[0].mxu0
    %v281 = vadd.f32 0.0, %v280
    %v282 = vpop.f32.mrb[0].mxu0
    %v283 = vadd.f32 0.0, %v282
    %284 = vmatprep.mubr.f32.mxu0 0.0
    %285 = vmatmul.mubr.f32.gmra.mrb[0].mxu0 %v163
    %v286 = vpop.f32.mrb[0].mxu0
    %v287 = vadd.f32 0.0, %v286
    %v288 = vpop.f32.mrb[0].mxu0
    %v289 = vadd.f32 0.0, %v288
    %290 = vmatprep.mubr.f32.mxu0 0.0
    %291 = vmatmul.mubr.f32.gmra.mrb[0].mxu0 %v164
    %v292 = vpop.f32.mrb[0].mxu0
    %v293 = vadd.f32 0.0, %v292
    %v294 = vpop.f32.mrb[0].mxu0
    %v295 = vadd.f32 0.0, %v294
    %296 = vmatprep.mubr.f32.mxu0 0.0
    %297 = vmatmul.mubr.f32.gmra.mrb[0].mxu0 %v165
    %v298 = vpop.f32.mrb[0].mxu0
    %v299 = vadd.f32 0.0, %v298
    %v300 = vpop.f32.mrb[0].mxu0
    %v301 = vadd.f32 0.0, %v300
    %302 = vdwg.mxu0
    %303 = vmatprep.subr.mxu0 0.0
    %304 = vmatpush1.msra.mxu0 %v168
    %305 = vmatprep.subr.mxu0 0.0
    %306 = vmatpush1.msra.mxu0 %v171
    %307 = vmatprep.subr.mxu0 0.0
    %308 = vmatpush1.msra.mxu0 %v174
    %309 = vmatprep.subr.mxu0 0.0
    %310 = vmatpush1.msra.mxu0 %v177
    %311 = vmatprep.subr.mxu0 0.0
    %312 = vmatpush1.msra.mxu0 %v180
    %313 = vmatprep.subr.mxu0 0.0
    %314 = vmatpush1.msra.mxu0 %v183
    %315 = vmatprep.subr.mxu0 0.0
    %316 = vmatpush1.msra.mxu0 %v186
    %317 = vmatprep.subr.mxu0 0.0
    %318 = vmatpush1.msra.mxu0 %v189
    %319 = vmatprep.subr.mxu0 0.0
    %320 = vmatpush1.msra.mxu0 %v192
    %321 = vmatprep.subr.mxu0 0.0
    %322 = vmatpush1.msra.mxu0 %v195
    %323 = vmatprep.subr.mxu0 0.0
    %324 = vmatpush1.msra.mxu0 %v198
    %325 = vmatprep.subr.mxu0 0.0
    %326 = vmatpush1.msra.mxu0 %v201
    %327 = vmatprep.subr.mxu0 0.0
    %328 = vmatpush1.msra.mxu0 %v204
    %329 = vmatprep.subr.mxu0 0.0
    %330 = vmatpush1.msra.mxu0 %v207
    %331 = vmatprep.subr.mxu0 0.0
    %332 = vmatpush1.msra.mxu0 %v210
    %333 = vmatprep.subr.mxu0 0.0
    %334 = vmatpush1.msra.mxu0 %v213
    %335 = vmatprep.subr.mxu0 0.0
    %336 = vmatpush1.msra.mxu0 0.0
    %337 = vmatprep.subr.mxu0 0.0
    %338 = vmatpush1.msra.mxu0 0.0
    %339 = vmatprep.subr.mxu0 0.0
    %340 = vmatpush1.msra.mxu0 0.0
    %341 = vmatprep.subr.mxu0 0.0
    %342 = vmatpush1.msra.mxu0 0.0
    %343 = vmatprep.subr.mxu0 0.0
    %344 = vmatpush1.msra.mxu0 0.0
    %345 = vmatprep.subr.mxu0 0.0
    %346 = vmatpush1.msra.mxu0 0.0
    %347 = vmatprep.subr.mxu0 0.0
    %348 = vmatpush1.msra.mxu0 0.0
    %349 = vmatprep.subr.mxu0 0.0
    %350 = vmatpush1.msra.mxu0 0.0
    %351 = vmatprep.subr.mxu0 0.0
    %352 = vmatpush1.msra.mxu0 0.0
    %353 = vmatprep.subr.mxu0 0.0
    %354 = vmatpush1.msra.mxu0 0.0
    %355 = vmatprep.subr.mxu0 0.0
    %356 = vmatpush1.msra.mxu0 0.0
    %357 = vmatprep.subr.mxu0 0.0
    %358 = vmatpush1.msra.mxu0 0.0
    %359 = vmatprep.subr.mxu0 0.0
    %360 = vmatpush1.msra.mxu0 0.0
    %361 = vmatprep.subr.mxu0 0.0
    %362 = vmatpush1.msra.mxu0 0.0
    %363 = vmatprep.subr.mxu0 0.0
    %364 = vmatpush1.msra.mxu0 0.0
    %365 = vmatprep.subr.mxu0 0.0
    %366 = vmatpush1.msra.mxu0 0.0
    %367 = vmatprep.mubr.f32.mxu0 0.0
    %368 = vmatmul.mubr.f32.gmra.mrb[0].mxu0 %v162
    %v369 = vpop.f32.mrb[0].mxu0
    %v370 = vadd.f32 0.0, %v369
    %v371 = vpop.f32.mrb[0].mxu0
    %372 = vmatprep.mubr.f32.mxu0 0.0
    %373 = vmatmul.mubr.f32.gmra.mrb[0].mxu0 %v163
    %v374 = vpop.f32.mrb[0].mxu0
    %v375 = vadd.f32 0.0, %v374
    %v376 = vpop.f32.mrb[0].mxu0
    %377 = vmatprep.mubr.f32.mxu0 0.0
    %378 = vmatmul.mubr.f32.gmra.mrb[0].mxu0 %v164
    %v379 = vpop.f32.mrb[0].mxu0
    %v380 = vadd.f32 0.0, %v379
    %v381 = vpop.f32.mrb[0].mxu0
    %382 = vmatprep.mubr.f32.mxu0 0.0
    %383 = vmatmul.mubr.f32.gmra.mrb[0].mxu0 %v165
    %v384 = vpop.f32.mrb[0].mxu0
    %v385 = vadd.f32 0.0, %v384
    %v386 = vpop.f32.mrb[0].mxu0
    %387 = vdwg.mxu0
    %v388 = vld [vmem:[#allocation7] sm:$0xff]
    %v389 = vld [vmem:[#allocation7 + $0x8] sm:$0xff]
    %v390 = vld [vmem:[#allocation7 + $0x10] sm:$0xff]
    %v391 = vld [vmem:[#allocation7 + $0x18] sm:$0xff]
    %v392 = vld [vmem:[#allocation7 + $0x20] sm:$0xff]
    %v393 = vld [vmem:[#allocation7 + $0x28] sm:$0xff]
    %v394 = vld [vmem:[#allocation7 + $0x30] sm:$0xff]
    %v395 = vld [vmem:[#allocation7 + $0x38] sm:$0xff]
    %v396 = vld [vmem:[#allocation7 + $0x40] sm:$0xff]
    %v397 = vld [vmem:[#allocation7 + $0x48] sm:$0xff]
    %v398 = vld [vmem:[#allocation7 + $0x50] sm:$0xff]
    %v399 = vld [vmem:[#allocation7 + $0x58] sm:$0xff]
    %v400 = vld [vmem:[#allocation7 + $0x60] sm:$0xff]
    %v401 = vld [vmem:[#allocation7 + $0x68] sm:$0xff]
    %v402 = vld [vmem:[#allocation7 + $0x70] sm:$0xff]
    %v403 = vld [vmem:[#allocation7 + $0x78] sm:$0xff]
    %404 = vmatprep.subr.mxu0 0.0
    %405 = vmatpush1.msra.mxu0 %v388
    %406 = vmatprep.subr.mxu0 0.0
    %407 = vmatpush1.msra.mxu0 %v389
    %408 = vmatprep.subr.mxu0 0.0
    %409 = vmatpush1.msra.mxu0 %v390
    %410 = vmatprep.subr.mxu0 0.0
    %411 = vmatpush1.msra.mxu0 %v391
    %412 = vmatprep.subr.mxu0 0.0
    %413 = vmatpush1.msra.mxu0 %v392
    %414 = vmatprep.subr.mxu0 0.0
    %415 = vmatpush1.msra.mxu0 %v393
    %416 = vmatprep.subr.mxu0 0.0
    %417 = vmatpush1.msra.mxu0 %v394
    %418 = vmatprep.subr.mxu0 0.0
    %419 = vmatpush1.msra.mxu0 %v395
    %420 = vmatprep.subr.mxu0 0.0
    %421 = vmatpush1.msra.mxu0 %v396
    %422 = vmatprep.subr.mxu0 0.0
    %423 = vmatpush1.msra.mxu0 %v397
    %424 = vmatprep.subr.mxu0 0.0
    %425 = vmatpush1.msra.mxu0 %v398
    %426 = vmatprep.subr.mxu0 0.0
    %427 = vmatpush1.msra.mxu0 %v399
    %428 = vmatprep.subr.mxu0 0.0
    %429 = vmatpush1.msra.mxu0 %v400
    %430 = vmatprep.subr.mxu0 0.0
    %431 = vmatpush1.msra.mxu0 %v401
    %432 = vmatprep.subr.mxu0 0.0
    %433 = vmatpush1.msra.mxu0 %v402
    %434 = vmatprep.subr.mxu0 0.0
    %435 = vmatpush1.msra.mxu0 %v403
    %436 = vmatprep.subr.mxu0 0.0
    %437 = vmatpush1.msra.mxu0 0.0
    %438 = vmatprep.subr.mxu0 0.0
    %439 = vmatpush1.msra.mxu0 0.0
    %440 = vmatprep.subr.mxu0 0.0
    %441 = vmatpush1.msra.mxu0 0.0
    %442 = vmatprep.subr.mxu0 0.0
    %443 = vmatpush1.msra.mxu0 0.0
    %444 = vmatprep.subr.mxu0 0.0
    %445 = vmatpush1.msra.mxu0 0.0
    %446 = vmatprep.subr.mxu0 0.0
    %447 = vmatpush1.msra.mxu0 0.0
    %448 = vmatprep.subr.mxu0 0.0
    %449 = vmatpush1.msra.mxu0 0.0
    %450 = vmatprep.subr.mxu0 0.0
    %451 = vmatpush1.msra.mxu0 0.0
    %452 = vmatprep.subr.mxu0 0.0
    %453 = vmatpush1.msra.mxu0 0.0
    %454 = vmatprep.subr.mxu0 0.0
    %455 = vmatpush1.msra.mxu0 0.0
    %456 = vmatprep.subr.mxu0 0.0
    %457 = vmatpush1.msra.mxu0 0.0
    %458 = vmatprep.subr.mxu0 0.0
    %459 = vmatpush1.msra.mxu0 0.0
    %460 = vmatprep.subr.mxu0 0.0
    %461 = vmatpush1.msra.mxu0 0.0
    %462 = vmatprep.subr.mxu0 0.0
    %463 = vmatpush1.msra.mxu0 0.0
    %464 = vmatprep.subr.mxu0 0.0
    %465 = vmatpush1.msra.mxu0 0.0
    %466 = vmatprep.subr.mxu0 0.0
    %467 = vmatpush1.msra.mxu0 0.0
    %468 = vmatprep.mubr.f32.mxu0 0.0
    %469 = vmatmul.mubr.f32.gmra.mrb[0].mxu0 %v281
    %v470 = vpop.f32.mrb[0].mxu0
    %v471 = vadd.f32 0.0, %v470
    %v472 = vpop.f32.mrb[0].mxu0
    %473 = vmatprep.mubr.f32.mxu0 0.0
    %474 = vmatmul.mubr.f32.gmra.mrb[0].mxu0 %v287
    %v475 = vpop.f32.mrb[0].mxu0
    %v476 = vadd.f32 0.0, %v475
    %v477 = vpop.f32.mrb[0].mxu0
    %478 = vmatprep.mubr.f32.mxu0 0.0
    %479 = vmatmul.mubr.f32.gmra.mrb[0].mxu0 %v293
    %v480 = vpop.f32.mrb[0].mxu0
    %v481 = vadd.f32 0.0, %v480
    %v482 = vpop.f32.mrb[0].mxu0
    %483 = vmatprep.mubr.f32.mxu0 0.0
    %484 = vmatmul.mubr.f32.gmra.mrb[0].mxu0 %v299
    %v485 = vpop.f32.mrb[0].mxu0
    %v486 = vadd.f32 0.0, %v485
    %v487 = vpop.f32.mrb[0].mxu0
    %488 = vdwg.mxu0
    %v489 = vld [vmem:[#allocation8] sm:$0xff]
    %v490 = vld [vmem:[#allocation8 + $0x8] sm:$0xff]
    %v491 = vld [vmem:[#allocation8 + $0x10] sm:$0xff]
    %v492 = vld [vmem:[#allocation8 + $0x18] sm:$0xff]
    %v493 = vld [vmem:[#allocation8 + $0x20] sm:$0xff]
    %v494 = vld [vmem:[#allocation8 + $0x28] sm:$0xff]
    %v495 = vld [vmem:[#allocation8 + $0x30] sm:$0xff]
    %v496 = vld [vmem:[#allocation8 + $0x38] sm:$0xff]
    %v497 = vld [vmem:[#allocation8 + $0x40] sm:$0xff]
    %v498 = vld [vmem:[#allocation8 + $0x48] sm:$0xff]
    %v499 = vld [vmem:[#allocation8 + $0x50] sm:$0xff]
    %v500 = vld [vmem:[#allocation8 + $0x58] sm:$0xff]
    %v501 = vld [vmem:[#allocation8 + $0x60] sm:$0xff]
    %v502 = vld [vmem:[#allocation8 + $0x68] sm:$0xff]
    %v503 = vld [vmem:[#allocation8 + $0x70] sm:$0xff]
    %v504 = vld [vmem:[#allocation8 + $0x78] sm:$0xff]
    %505 = vmatprep.subr.mxu0 0.0
    %506 = vmatpush1.msra.mxu0 %v489
    %507 = vmatprep.subr.mxu0 0.0
    %508 = vmatpush1.msra.mxu0 %v490
    %509 = vmatprep.subr.mxu0 0.0
    %510 = vmatpush1.msra.mxu0 %v491
    %511 = vmatprep.subr.mxu0 0.0
    %512 = vmatpush1.msra.mxu0 %v492
    %513 = vmatprep.subr.mxu0 0.0
    %514 = vmatpush1.msra.mxu0 %v493
    %515 = vmatprep.subr.mxu0 0.0
    %516 = vmatpush1.msra.mxu0 %v494
    %517 = vmatprep.subr.mxu0 0.0
    %518 = vmatpush1.msra.mxu0 %v495
    %519 = vmatprep.subr.mxu0 0.0
    %520 = vmatpush1.msra.mxu0 %v496
    %521 = vmatprep.subr.mxu0 0.0
    %522 = vmatpush1.msra.mxu0 %v497
    %523 = vmatprep.subr.mxu0 0.0
    %524 = vmatpush1.msra.mxu0 %v498
    %525 = vmatprep.subr.mxu0 0.0
    %526 = vmatpush1.msra.mxu0 %v499
    %527 = vmatprep.subr.mxu0 0.0
    %528 = vmatpush1.msra.mxu0 %v500
    %529 = vmatprep.subr.mxu0 0.0
    %530 = vmatpush1.msra.mxu0 %v501
    %531 = vmatprep.subr.mxu0 0.0
    %532 = vmatpush1.msra.mxu0 %v502
    %533 = vmatprep.subr.mxu0 0.0
    %534 = vmatpush1.msra.mxu0 %v503
    %535 = vmatprep.subr.mxu0 0.0
    %536 = vmatpush1.msra.mxu0 %v504
    %537 = vmatprep.subr.mxu0 0.0
    %538 = vmatpush1.msra.mxu0 0.0
    %539 = vmatprep.subr.mxu0 0.0
    %540 = vmatpush1.msra.mxu0 0.0
    %541 = vmatprep.subr.mxu0 0.0
    %542 = vmatpush1.msra.mxu0 0.0
    %543 = vmatprep.subr.mxu0 0.0
    %544 = vmatpush1.msra.mxu0 0.0
    %545 = vmatprep.subr.mxu0 0.0
    %546 = vmatpush1.msra.mxu0 0.0
    %547 = vmatprep.subr.mxu0 0.0
    %548 = vmatpush1.msra.mxu0 0.0
    %549 = vmatprep.subr.mxu0 0.0
    %550 = vmatpush1.msra.mxu0 0.0
    %551 = vmatprep.subr.mxu0 0.0
    %552 = vmatpush1.msra.mxu0 0.0
    %553 = vmatprep.subr.mxu0 0.0
    %554 = vmatpush1.msra.mxu0 0.0
    %555 = vmatprep.subr.mxu0 0.0
    %556 = vmatpush1.msra.mxu0 0.0
    %557 = vmatprep.subr.mxu0 0.0
    %558 = vmatpush1.msra.mxu0 0.0
    %559 = vmatprep.subr.mxu0 0.0
    %560 = vmatpush1.msra.mxu0 0.0
    %561 = vmatprep.subr.mxu0 0.0
    %562 = vmatpush1.msra.mxu0 0.0
    %563 = vmatprep.subr.mxu0 0.0
    %564 = vmatpush1.msra.mxu0 0.0
    %565 = vmatprep.subr.mxu0 0.0
    %566 = vmatpush1.msra.mxu0 0.0
    %567 = vmatprep.subr.mxu0 0.0
    %568 = vmatpush1.msra.mxu0 0.0
    %569 = vmatprep.mubr.f32.mxu0 0.0
    %570 = vmatmul.mubr.f32.gmra.mrb[0].mxu0 %v283
    %v571 = vpop.f32.mrb[0].mxu0
    %v572 = vadd.f32 0.0, %v571
    %v573 = vpop.f32.mrb[0].mxu0
    %574 = vmatprep.mubr.f32.mxu0 0.0
    %575 = vmatmul.mubr.f32.gmra.mrb[0].mxu0 %v289
    %v576 = vpop.f32.mrb[0].mxu0
    %v577 = vadd.f32 0.0, %v576
    %v578 = vpop.f32.mrb[0].mxu0
    %579 = vmatprep.mubr.f32.mxu0 0.0
    %580 = vmatmul.mubr.f32.gmra.mrb[0].mxu0 %v295
    %v581 = vpop.f32.mrb[0].mxu0
    %v582 = vadd.f32 0.0, %v581
    %v583 = vpop.f32.mrb[0].mxu0
    %584 = vmatprep.mubr.f32.mxu0 0.0
    %585 = vmatmul.mubr.f32.gmra.mrb[0].mxu0 %v301
    %v586 = vpop.f32.mrb[0].mxu0
    %v587 = vadd.f32 0.0, %v586
    %v588 = vpop.f32.mrb[0].mxu0
    %589 = vdwg.mxu0
    %v590 = vld [vmem:[#allocation10] sm:$0xff]
    %v591 = vld [vmem:[#allocation10 + $0x8] sm:$0xff]
    %v592 = vld [vmem:[#allocation10 + $0x10] sm:$0xff]
    %v593 = vld [vmem:[#allocation10 + $0x18] sm:$0xff]
    %v594 = vld [vmem:[#allocation10 + $0x20] sm:$0xff]
    %v595 = vld [vmem:[#allocation10 + $0x28] sm:$0xff]
    %v596 = vld [vmem:[#allocation10 + $0x30] sm:$0xff]
    %v597 = vld [vmem:[#allocation10 + $0x38] sm:$0xff]
    %v598 = vld [vmem:[#allocation10 + $0x40] sm:$0xff]
    %v599 = vld [vmem:[#allocation10 + $0x48] sm:$0xff]
    %v600 = vld [vmem:[#allocation10 + $0x50] sm:$0xff]
    %v601 = vld [vmem:[#allocation10 + $0x58] sm:$0xff]
    %v602 = vld [vmem:[#allocation10 + $0x60] sm:$0xff]
    %v603 = vld [vmem:[#allocation10 + $0x68] sm:$0xff]
    %v604 = vld [vmem:[#allocation10 + $0x70] sm:$0xff]
    %v605 = vld [vmem:[#allocation10 + $0x78] sm:$0xff]
    %606 = vmatprep.subr.mxu0 0.0
    %607 = vmatpush1.msra.mxu0 %v590
    %608 = vmatprep.subr.mxu0 0.0
    %609 = vmatpush1.msra.mxu0 %v591
    %610 = vmatprep.subr.mxu0 0.0
    %611 = vmatpush1.msra.mxu0 %v592
    %612 = vmatprep.subr.mxu0 0.0
    %613 = vmatpush1.msra.mxu0 %v593
    %614 = vmatprep.subr.mxu0 0.0
    %615 = vmatpush1.msra.mxu0 %v594
    %616 = vmatprep.subr.mxu0 0.0
    %617 = vmatpush1.msra.mxu0 %v595
    %618 = vmatprep.subr.mxu0 0.0
    %619 = vmatpush1.msra.mxu0 %v596
    %620 = vmatprep.subr.mxu0 0.0
    %621 = vmatpush1.msra.mxu0 %v597
    %622 = vmatprep.subr.mxu0 0.0
    %623 = vmatpush1.msra.mxu0 %v598
    %624 = vmatprep.subr.mxu0 0.0
    %625 = vmatpush1.msra.mxu0 %v599
    %626 = vmatprep.subr.mxu0 0.0
    %627 = vmatpush1.msra.mxu0 %v600
    %628 = vmatprep.subr.mxu0 0.0
    %629 = vmatpush1.msra.mxu0 %v601
    %630 = vmatprep.subr.mxu0 0.0
    %631 = vmatpush1.msra.mxu0 %v602
    %632 = vmatprep.subr.mxu0 0.0
    %633 = vmatpush1.msra.mxu0 %v603
    %634 = vmatprep.subr.mxu0 0.0
    %635 = vmatpush1.msra.mxu0 %v604
    %636 = vmatprep.subr.mxu0 0.0
    %637 = vmatpush1.msra.mxu0 %v605
    %638 = vmatprep.subr.mxu0 0.0
    %639 = vmatpush1.msra.mxu0 0.0
    %640 = vmatprep.subr.mxu0 0.0
    %641 = vmatpush1.msra.mxu0 0.0
    %642 = vmatprep.subr.mxu0 0.0
    %643 = vmatpush1.msra.mxu0 0.0
    %644 = vmatprep.subr.mxu0 0.0
    %645 = vmatpush1.msra.mxu0 0.0
    %646 = vmatprep.subr.mxu0 0.0
    %647 = vmatpush1.msra.mxu0 0.0
    %648 = vmatprep.subr.mxu0 0.0
    %649 = vmatpush1.msra.mxu0 0.0
    %650 = vmatprep.subr.mxu0 0.0
    %651 = vmatpush1.msra.mxu0 0.0
    %652 = vmatprep.subr.mxu0 0.0
    %653 = vmatpush1.msra.mxu0 0.0
    %654 = vmatprep.subr.mxu0 0.0
    %655 = vmatpush1.msra.mxu0 0.0
    %656 = vmatprep.subr.mxu0 0.0
    %657 = vmatpush1.msra.mxu0 0.0
    %658 = vmatprep.subr.mxu0 0.0
    %659 = vmatpush1.msra.mxu0 0.0
    %660 = vmatprep.subr.mxu0 0.0
    %661 = vmatpush1.msra.mxu0 0.0
    %662 = vmatprep.subr.mxu0 0.0
    %663 = vmatpush1.msra.mxu0 0.0
    %664 = vmatprep.subr.mxu0 0.0
    %665 = vmatpush1.msra.mxu0 0.0
    %666 = vmatprep.subr.mxu0 0.0
    %667 = vmatpush1.msra.mxu0 0.0
    %668 = vmatprep.subr.mxu0 0.0
    %669 = vmatpush1.msra.mxu0 0.0
    %670 = vmatprep.mubr.f32.mxu0 0.0
    %671 = vmatmul.mubr.f32.gmra.mrb[0].mxu0 %v370
    %v672 = vpop.f32.mrb[0].mxu0
    %v673 = vadd.f32 0.0, %v672
    %v674 = vpop.f32.mrb[0].mxu0
    %675 = vmatprep.mubr.f32.mxu0 0.0
    %676 = vmatmul.mubr.f32.gmra.mrb[0].mxu0 %v375
    %v677 = vpop.f32.mrb[0].mxu0
    %v678 = vadd.f32 0.0, %v677
    %v679 = vpop.f32.mrb[0].mxu0
    %680 = vmatprep.mubr.f32.mxu0 0.0
    %681 = vmatmul.mubr.f32.gmra.mrb[0].mxu0 %v380
    %v682 = vpop.f32.mrb[0].mxu0
    %v683 = vadd.f32 0.0, %v682
    %v684 = vpop.f32.mrb[0].mxu0
    %685 = vmatprep.mubr.f32.mxu0 0.0
    %686 = vmatmul.mubr.f32.gmra.mrb[0].mxu0 %v385
    %v687 = vpop.f32.mrb[0].mxu0
    %v688 = vadd.f32 0.0, %v687
    %v689 = vpop.f32.mrb[0].mxu0
    %690 = vdwg.mxu0
    %691 = vst [vmem:[#allocation11] sm:$0xff] %v471
    %692 = vst [vmem:[#allocation11 + $0x8] sm:$0xff] %v572
    %693 = vst [vmem:[#allocation11 + $0x10] sm:$0xff] %v673
    %694 = vst [vmem:[#allocation11 + $0x18] sm:$0xff] %v476
    %695 = vst [vmem:[#allocation11 + $0x20] sm:$0xff] %v577
    %696 = vst [vmem:[#allocation11 + $0x28] sm:$0xff] %v678
    %697 = vst [vmem:[#allocation11 + $0x30] sm:$0xff] %v481
    %698 = vst [vmem:[#allocation11 + $0x38] sm:$0xff] %v582
    %699 = vst [vmem:[#allocation11 + $0x40] sm:$0xff] %v683
    %700 = vst [vmem:[#allocation11 + $0x48] sm:$0xff] %v486
    %701 = vst [vmem:[#allocation11 + $0x50] sm:$0xff] %v587
    %702 = vst [vmem:[#allocation11 + $0x58] sm:$0xff] %v688
    // Predicated region
    $region50: #{tpu_custom_call.1} parent=1 // pred_check
      _
    $region51: #{tpu_custom_call.1} parent=1 // pred_check_branch
      %704 = sbr.rel (0) target = $region53
    $region52: #{tpu_custom_call.1} parent=1 // pred_region
      %s706 = ssub.s32 1536, 1536
      %707 = vsyncadd [#allocation4], %s706
      %s708 = sshll.u32 [#allocation11], 4
      %s709 = int_to_ptr.vmem [resolvable:$true] %s708
      %714 = dma.vmem_to_hbm [thread:$0]  %s709, 1536, %s7, [#allocation4], 384, 384, 24
    $region53: #{tpu_custom_call.1} parent=1 // pred_fallthru
      _
    // Predicated region
    $region54: #{tpu_custom_call.1} parent=1 // pred_check
      _
    $region55: #{tpu_custom_call.1} parent=1 // pred_check_branch
      %716 = sbr.rel (0) target = $region57
    $region56: #{tpu_custom_call.1} parent=1 // pred_region
      %717 = dma.done [#allocation4], 1536
    $region57: #{tpu_custom_call.1} parent=1 // pred_fallthru
      _
    %718 = vsyncpa [#allocation3], 1
    %719 = vsyncpa [#allocation6], 1
    %720 = vsyncpa [#allocation9], 1
    %721 = vsyncpa [#allocation4], 1

</llo_original>
